<compile_context>
chip_gen: v6e
topology: v6e:2x2x1
jax: 0.10.0
libtpu: 0.0.40
codegen_flags: <defaults>
</compile_context>

<pallas_src>
import numpy as np
import jax
import jax.numpy as jnp
from jax.experimental import pallas as pl
from jax.experimental.pallas import tpu as pltpu

IMAGE_GRAY_MEAN = 0.5
IMAGE_GRAY_STD = 0.5

_LANES = 128
_SUBLANE = {1: 32, 2: 16, 4: 8, 8: 8}  # (sublane, 128) tile rule per itemsize


def _round_up(a, m):
    return ((a + m - 1) // m) * m


def gray_forward(x, mean=IMAGE_GRAY_MEAN, std=IMAGE_GRAY_STD, *, max_block_rows=4096):
    """Pallas implementation of Gray.forward. Works for any input shape/rank."""
    orig_shape = x.shape
    # PyTorch promotes integer images to float via the float mean/std buffers; match it.
    if not jnp.issubdtype(x.dtype, jnp.floating):
        x = x.astype(jnp.float32)
    dtype = x.dtype
    itemsize = jnp.dtype(dtype).itemsize
    total = int(np.prod(orig_shape)) if len(orig_shape) > 0 else 1

    # Static affine constants (exact for std=0.5); FMA is done in f32 inside the kernel.
    scale = np.float32(1.0 / std)
    shift = np.float32(-mean / std)

    # Flatten to a lane-dense (rows, 128) view.  Only pad the sub-128 remainder
    # (<= 127 elements); anything beyond that is handled by a non-divisible grid.
    rem = total % _LANES
    padded_total = total if rem == 0 else total + (_LANES - rem)
    x_flat = x.reshape(-1)
    if padded_total != total:
        x_flat = jnp.pad(x_flat, (0, padded_total - total))
    rows = padded_total // _LANES
    x2d = x_flat.reshape(rows, _LANES)

    # Row tiling: ~2 MiB f32 blocks, multiple of the dtype sublane tile, and at least
    # 2 grid steps when possible so "parallel" can shard across TCs (v7x megacore).
    sublane = _SUBLANE.get(itemsize, 8)
    max_rb = max(sublane, (max_block_rows // sublane) * sublane)
    row_block = min(max_rb, _round_up(pl.cdiv(rows, 2), sublane))
    row_block = max(row_block, sublane)
    if row_block >= rows:
        row_block = rows  # single block == full array dims (always a legal BlockSpec)
    grid = (pl.cdiv(rows, row_block),)

    def kernel(x_ref, o_ref):
        # (x - mean) / std folded into one FMA, computed in f32, cast at the store.
        xv = x_ref[...].astype(jnp.float32)
        o_ref[...] = (xv * scale + shift).astype(o_ref.dtype)

    out2d = pl.pallas_call(
        kernel,
        grid=grid,
        in_specs=[pl.BlockSpec((row_block, _LANES), lambda i: (i, 0))],
        out_specs=pl.BlockSpec((row_block, _LANES), lambda i: (i, 0)),
        out_shape=jax.ShapeDtypeStruct((rows, _LANES), dtype),
        compiler_params=pltpu.CompilerParams(
            dimension_semantics=("parallel",),
            vmem_limit_bytes=32 * 1024 * 1024,
        ),
        cost_estimate=pl.CostEstimate(
            flops=total, transcendentals=0, bytes_accessed=2 * total * itemsize),
    )(x2d)

    out_flat = out2d.reshape(-1)
    if padded_total != total:
        out_flat = out_flat[:total]
    return out_flat.reshape(orig_shape)


def _ref_forward(x, mean=IMAGE_GRAY_MEAN, std=IMAGE_GRAY_STD):
    """Pure-JAX reference matching the PyTorch module's forward."""
    if not jnp.issubdtype(x.dtype, jnp.floating):
        x = x.astype(jnp.float32)
    return (x - mean) / std


if __name__ == "__main__":
    key = jax.random.PRNGKey(0)

    # Single-channel gray images, small shape consistent with the module.
    N, C, H, W = 2, 1, 16, 16
    x = jax.random.normal(key, (N, C, H, W), jnp.float32)

    out = jax.block_until_ready(gray_forward(x))
    ref = jax.block_until_ready(_ref_forward(x))
    assert out.shape == x.shape and out.dtype == x.dtype
    np.testing.assert_allclose(np.asarray(out), np.asarray(ref), rtol=1e-6, atol=1e-6)

    # Non-128-divisible total exercises the (tiny) remainder-pad path.
    x_odd = jax.random.normal(jax.random.PRNGKey(1), (3, 1, 17, 13), jnp.float32)
    out_odd = jax.block_until_ready(gray_forward(x_odd))
    np.testing.assert_allclose(
        np.asarray(out_odd), np.asarray(_ref_forward(x_odd)), rtol=1e-6, atol=1e-6)

    # bf16 path: FMA in f32, cast at the store.
    x_bf = x.astype(jnp.bfloat16)
    out_bf = jax.block_until_ready(gray_forward(x_bf))
    np.testing.assert_allclose(
        np.asarray(out_bf, dtype=np.float32),
        np.asarray(_ref_forward(x_bf), dtype=np.float32), rtol=1e-2, atol=1e-2)

    print("KERNEL_OK")
</pallas_src>

<mosaic_0001>
module attributes {stable_mosaic.version = 11 : i64} {
  func.func @kernel(%arg0: i32, %arg1: memref<4x128xf32, #tpu.memory_space<vmem>>, %arg2: memref<4x128xf32, #tpu.memory_space<vmem>>) attributes {dimension_semantics = [#tpu.dimension_semantics<parallel>], iteration_bounds = array<i64: 1>, scalar_prefetch = 0 : i64, scratch_operands = 0 : i64, tpu.core_type = #tpu.core_type<tc>, window_params = [{transform_indices = @transform_0, window_bounds = array<i64: 4, 128>}, {transform_indices = @transform_1, window_bounds = array<i64: 4, 128>}]} {
    %c0 = arith.constant 0 : index
    %c0_0 = arith.constant 0 : index
    %0 = vector.load %arg1[%c0, %c0_0] : memref<4x128xf32, #tpu.memory_space<vmem>>, vector<4x128xf32>
    %cst = arith.constant 2.000000e+00 : f32
    %1 = vector.broadcast %cst : f32 to vector<4x128xf32>
    %2 = arith.mulf %0, %1 : vector<4x128xf32>
    %cst_1 = arith.constant -1.000000e+00 : f32
    %3 = vector.broadcast %cst_1 : f32 to vector<4x128xf32>
    %4 = arith.addf %2, %3 : vector<4x128xf32>
    %c0_2 = arith.constant 0 : index
    %c0_3 = arith.constant 0 : index
    %5 = vector.load %arg2[%c0_2, %c0_3] : memref<4x128xf32, #tpu.memory_space<vmem>>, vector<4x128xf32>
    tpu.vector_store %arg2[%c0_2, %c0_3], %4 {strides = array<i32>} : memref<4x128xf32, #tpu.memory_space<vmem>>, vector<4x128xf32>,
    return
  }
  func.func @transform_0(%arg0: i32) -> (i32, i32) {
    %c0_i32 = arith.constant 0 : i32
    %c0_i32_0 = arith.constant 0 : i32
    return %arg0, %c0_i32 : i32, i32
  }
  func.func @transform_1(%arg0: i32) -> (i32, i32) {
    %c0_i32 = arith.constant 0 : i32
    %c0_i32_0 = arith.constant 0 : i32
    return %arg0, %c0_i32 : i32, i32
  }
}

</mosaic_0001>

<llo_original>
// kernel: tpu_custom_call.1
$region0: #{tpu_custom_call.1}
  #allocation0 [shape = 'u32[]', space=smem, size = 0x4, offset = 0x4, fixed_abs, tag = 'smem constant byte address 0x4 - core index']
  #allocation1 [shape = 'u32[144,128]{1,0:T(1,128)}', space=vmem, size = 0x12000, scoped, tag = 'internal scratch']
  %s0 = inlined_call_operand.hbm [shape: f32[4,128], index: 0, kind: input, shape index: {}]
  %s1 = inlined_call_operand.hbm [shape: f32[4,128], index: 1, kind: output, shape index: {}]
  %s2 = sld [smem:[#allocation0]]
  $region18: #{tpu_custom_call.1} parent=0
    _
  %s4 = ssub.s32 1, %s2
  %s5 = scalar_select 0, %s4, %s2
  $region1: #{tpu_custom_call.1} parent=0
    #allocation2 [shape = 'u8[2048]{0}', space=vmem, size = 0x800, scoped, tag = 'input window, operand 0, single buffered']
    #allocation3 [shape = 's32[1]{0}', space=sflag, size = 0x4, scoped, tag = 'scoped memory for tpu_custom_call.1']
    #allocation4 [shape = 's32[1]{0}', space=sflag, size = 0x4, scoped, tag = 'scoped memory for tpu_custom_call.1']
    #allocation5 [shape = 'u8[2048]{0}', space=vmem, size = 0x800, scoped, tag = 'output window, operand 0, single buffered']
    %6 = vsyncpa [#allocation3], 0
    %7 = vsyncpa [#allocation4], 0
    // Predicated region
    $region2: #{tpu_custom_call.1} parent=1 // pred_check
      _
    $region3: #{tpu_custom_call.1} parent=1 // pred_check_branch
      %9 = sbr.rel (0) target = $region5
    $region4: #{tpu_custom_call.1} parent=1 // pred_region
      %s11 = ssub.s32 64, 64
      %12 = vsyncadd [#allocation3], %s11
      %s14 = sshll.u32 [#allocation2], 4
      %s15 = int_to_ptr.vmem [resolvable:$true] %s14
      %17 = dma.hbm_to_vmem [thread:$0]  %s0, 64, %s15, [#allocation3]
    $region5: #{tpu_custom_call.1} parent=1 // pred_fallthru
      _
    // Predicated region
    $region6: #{tpu_custom_call.1} parent=1 // pred_check
      _
    $region7: #{tpu_custom_call.1} parent=1 // pred_check_branch
      %19 = sbr.rel (0) target = $region9
    $region8: #{tpu_custom_call.1} parent=1 // pred_region
      %20 = dma.done [#allocation3], 64
    $region9: #{tpu_custom_call.1} parent=1 // pred_fallthru
      _
    %v21 = vld [vmem:[#allocation2] sm:$0xf]
    %v22 = vmul.f32 %v21, 2.0
    %v23 = vadd.f32 %v22, -1.0
    %24 = vst [vmem:[#allocation5] sm:$0xf] %v23
    // Predicated region
    $region10: #{tpu_custom_call.1} parent=1 // pred_check
      _
    $region11: #{tpu_custom_call.1} parent=1 // pred_check_branch
      %26 = sbr.rel (0) target = $region13
    $region12: #{tpu_custom_call.1} parent=1 // pred_region
      %s28 = ssub.s32 64, 64
      %29 = vsyncadd [#allocation4], %s28
      %s31 = sshll.u32 [#allocation5], 4
      %s32 = int_to_ptr.vmem [resolvable:$true] %s31
      %34 = dma.vmem_to_hbm [thread:$0]  %s32, 64, %s1, [#allocation4]
    $region13: #{tpu_custom_call.1} parent=1 // pred_fallthru
      _
    // Predicated region
    $region14: #{tpu_custom_call.1} parent=1 // pred_check
      _
    $region15: #{tpu_custom_call.1} parent=1 // pred_check_branch
      %36 = sbr.rel (0) target = $region17
    $region16: #{tpu_custom_call.1} parent=1 // pred_region
      %37 = dma.done [#allocation4], 64
    $region17: #{tpu_custom_call.1} parent=1 // pred_fallthru
      _
    %38 = vsyncpa [#allocation3], 1
    %39 = vsyncpa [#allocation4], 1

</llo_original>
